<compile_context>
chip_gen: v5e
topology: v5e:2x2
jax: 0.10.0
libtpu: 0.0.40
codegen_flags: <defaults>
</compile_context>

<pallas_src>
import functools

import jax
import jax.numpy as jnp
from jax.experimental import pallas as pl
from jax.experimental.pallas import tpu as pltpu


def _round_up(x, m):
    return ((x + m - 1) // m) * m


def _lacunarity_kernel(x_ref, o_ref, s1_ref, s2_ref, *, n_pts, tp, eps, tail_valid):
    # x_ref  : (TR, TP) tile of flattened images (rows x pixels), native dtype
    # o_ref  : (TR, 128) lane-dense per-row result (value replicated across lanes)
    # s1_ref : (TR, 128) f32 lane-wide partial sums
    # s2_ref : (TR, 128) f32 lane-wide partial sums of squares
    k = pl.program_id(1)
    n_k = pl.num_programs(1)
    n_groups = tp // 128

    @pl.when(k == 0)
    def _init():
        s1_ref[...] = jnp.zeros_like(s1_ref)
        s2_ref[...] = jnp.zeros_like(s2_ref)

    def _accumulate(valid_cols):
        # valid_cols is a *static* int: number of valid columns in this tile.
        tr = x_ref.shape[0]
        p1 = jnp.zeros((tr, 128), jnp.float32)
        p2 = jnp.zeros((tr, 128), jnp.float32)
        for j in range(n_groups):
            start = j * 128
            rem = valid_cols - start
            if rem <= 0:
                break  # remaining lane groups are fully out of range -> skip loads
            xs = x_ref[:, start:start + 128].astype(jnp.float32)
            if rem < 128:
                # Only the single straddling lane group of the last tile pays this.
                lane = jax.lax.broadcasted_iota(jnp.int32, xs.shape, 1)
                xs = jnp.where(lane < rem, xs, 0.0)
            p1 = p1 + xs
            p2 = p2 + xs * xs
        s1_ref[...] += p1
        s2_ref[...] += p2

    if tail_valid == tp:
        # n_pts divides TP exactly: every tile runs the unmasked path.
        _accumulate(tp)
    else:
        @pl.when(k < n_k - 1)
        def _body():
            _accumulate(tp)

        @pl.when(k == n_k - 1)
        def _tail():
            _accumulate(tail_valid)

    @pl.when(k == n_k - 1)
    def _finalize():
        n_f = jnp.float32(n_pts)
        # Work in means (mirrors the PyTorch mean-based formulation; keeps the
        # intermediates small before the near-cancelling "- 1").
        gap_x = jnp.sum(s1_ref[...], axis=-1, keepdims=True) * jnp.float32(255.0 / n_pts)
        gap_sq = jnp.sum(s2_ref[...], axis=-1, keepdims=True) * jnp.float32(255.0 * 255.0 / n_pts)
        num = (n_f * n_f) * gap_sq
        den = (n_f * gap_x) ** 2
        l_r = num / (den + jnp.float32(eps)) - jnp.float32(1.0)
        o_ref[...] = jnp.broadcast_to(l_r, o_ref.shape).astype(o_ref.dtype)


def base_lacunarity(x, *, eps=1e-05, row_tile=256, max_pixel_tile=32768,
                    block_target_bytes=4 * 1024 * 1024):
    """x: (N, C, H, W) array -> (N, C, 1, 1) lacunarity (global pooling path).

    Output is always float32 (the ratio of nearly-cancelling quantities loses
    precision if emitted in low-precision dtypes).
    """
    n, c, h, w = x.shape
    n_pts = h * w
    rows = n * c

    # Keep the input in its native dtype through the DMA (cast happens in-kernel).
    x2d = x.reshape(rows, n_pts)
    itemsize = jnp.dtype(x.dtype).itemsize
    # Dtype-aware sublane minimum: f32 -> 8, bf16 -> 16, int8/fp8 -> 32.
    sublane = {4: 8, 2: 16, 1: 32}.get(itemsize, 8)

    # Row tile: aligned to the packed-layout sublane minimum. If the "parallel"
    # row axis would collapse to one tile, split it so both v7x TensorCores get
    # work (harmless extra grid step on 1-TC v5e/v6e).
    tr = min(_round_up(row_tile, sublane), _round_up(rows, sublane))
    if pl.cdiv(rows, tr) == 1 and rows > sublane:
        tr = _round_up(pl.cdiv(rows, 2), sublane)

    # Pixel tile: adaptive so each input block lands near block_target_bytes
    # (roofline knee), capped to bound the unrolled lane-group loop and VMEM.
    tp = block_target_bytes // max(1, tr * itemsize)
    tp = max(128, (tp // 128) * 128)
    tp = min(tp, max_pixel_tile, _round_up(n_pts, 128))

    r_tiles = pl.cdiv(rows, tr)
    k_tiles = pl.cdiv(n_pts, tp)
    tail_valid = n_pts - (k_tiles - 1) * tp  # valid columns in the last pixel tile

    kernel = functools.partial(
        _lacunarity_kernel, n_pts=n_pts, tp=tp, eps=eps, tail_valid=tail_valid
    )

    out = pl.pallas_call(
        kernel,
        out_shape=jax.ShapeDtypeStruct((r_tiles * tr, 128), jnp.float32),
        grid=(r_tiles, k_tiles),
        in_specs=[pl.BlockSpec((tr, tp), lambda i, k: (i, k))],
        # Same output block across k => accumulator-style resident output.
        out_specs=pl.BlockSpec((tr, 128), lambda i, k: (i, 0)),
        scratch_shapes=[
            pltpu.VMEM((tr, 128), jnp.float32),  # lane-wide partial sum(x)
            pltpu.VMEM((tr, 128), jnp.float32),  # lane-wide partial sum(x^2)
        ],
        compiler_params=pltpu.CompilerParams(
            dimension_semantics=("parallel", "arbitrary"),
            vmem_limit_bytes=32 * 1024 * 1024,
        ),
        cost_estimate=pl.CostEstimate(
            flops=3 * rows * n_pts,
            transcendentals=0,
            bytes_accessed=rows * n_pts * itemsize + r_tiles * tr * 128 * 4,
        ),
    )(x2d)

    # Drop row-padding, take lane 0 of the lane-dense result, restore (N, C, 1, 1).
    return out[:rows, 0].reshape(n, c, 1, 1)


def _reference(x, eps=1e-05):
    # Pure-JAX reference mirroring the PyTorch forward for validation.
    xf = x.astype(jnp.float32) * 255.0
    sq = xf ** 2
    n_pts = x.shape[-2] * x.shape[-1]
    gap_sq = jnp.mean(sq, axis=(-2, -1), keepdims=True)
    gap_x = jnp.mean(xf, axis=(-2, -1), keepdims=True)
    l_num = (n_pts * n_pts) * gap_sq
    l_den = (n_pts * gap_x) ** 2
    return l_num / (l_den + eps) - 1.0


if __name__ == "__main__":
    root = jax.random.PRNGKey(0)
    k1, k2, k3 = jax.random.split(root, 3)

    # Primary small test (exact-fit tiles, single pixel tile).
    x = jax.random.uniform(k1, (2, 4, 16, 16), dtype=jnp.float32)
    out = jax.block_until_ready(base_lacunarity(x))
    ref = _reference(x)
    assert out.shape == (2, 4, 1, 1), out.shape
    assert jnp.allclose(out, ref, rtol=1e-4, atol=1e-4), (out, ref)

    # Partial row / pixel tiles (tail masking + padded-row discard).
    x2 = jax.random.uniform(k2, (2, 3, 20, 18), dtype=jnp.float32)
    out2 = jax.block_until_ready(base_lacunarity(x2))
    ref2 = _reference(x2)
    assert out2.shape == (2, 3, 1, 1), out2.shape
    assert jnp.allclose(out2, ref2, rtol=1e-4, atol=1e-4), (out2, ref2)

    # Multi-tile reduction axis + split row axis (forces k_tiles > 1 and r_tiles = 2).
    x3 = jax.random.uniform(k3, (2, 8, 36, 36), dtype=jnp.float32)
    out3 = jax.block_until_ready(base_lacunarity(x3, max_pixel_tile=512))
    ref3 = _reference(x3)
    assert out3.shape == (2, 8, 1, 1), out3.shape
    assert jnp.allclose(out3, ref3, rtol=1e-4, atol=1e-4), (out3, ref3)

    print("KERNEL_OK")
</pallas_src>

<mosaic_0001>
module attributes {stable_mosaic.version = 11 : i64} {
  func.func @_lacunarity_kernel(%arg0: i32, %arg1: i32, %arg2: memref<8x256xf32, #tpu.memory_space<vmem>>, %arg3: memref<8x128xf32, #tpu.memory_space<vmem>>, %arg4: memref<8x128xf32, #tpu.memory_space<vmem>>, %arg5: memref<8x128xf32, #tpu.memory_space<vmem>>) attributes {dimension_semantics = [#tpu.dimension_semantics<parallel>, #tpu.dimension_semantics<arbitrary>], iteration_bounds = array<i64: 1, 1>, scalar_prefetch = 0 : i64, scratch_operands = 2 : i64, tpu.core_type = #tpu.core_type<tc>, window_params = [{transform_indices = @transform_0, window_bounds = array<i64: 8, 256>}, {transform_indices = @transform_1, window_bounds = array<i64: 8, 128>}]} {
    %c0_i32 = arith.constant 0 : i32
    %0 = arith.cmpi eq, %arg1, %c0_i32 : i32
    %1 = arith.extui %0 : i1 to i32
    %c0_i32_0 = arith.constant 0 : i32
    %2 = arith.cmpi ne, %1, %c0_i32_0 : i32
    scf.if %2 {
      %cst_14 = arith.constant 0.000000e+00 : f32
      %22 = vector.broadcast %cst_14 : f32 to vector<8x128xf32>
      %c0_15 = arith.constant 0 : index
      %c0_16 = arith.constant 0 : index
      %23 = vector.load %arg4[%c0_15, %c0_16] : memref<8x128xf32, #tpu.memory_space<vmem>>, vector<8x128xf32>
      tpu.vector_store %arg4[%c0_15, %c0_16], %22 {strides = array<i32>} : memref<8x128xf32, #tpu.memory_space<vmem>>, vector<8x128xf32>,
      %cst_17 = arith.constant 0.000000e+00 : f32
      %24 = vector.broadcast %cst_17 : f32 to vector<8x128xf32>
      %c0_18 = arith.constant 0 : index
      %c0_19 = arith.constant 0 : index
      %25 = vector.load %arg5[%c0_18, %c0_19] : memref<8x128xf32, #tpu.memory_space<vmem>>, vector<8x128xf32>
      tpu.vector_store %arg5[%c0_18, %c0_19], %24 {strides = array<i32>} : memref<8x128xf32, #tpu.memory_space<vmem>>, vector<8x128xf32>,
    } else {
    }
    %cst = arith.constant 0.000000e+00 : f32
    %3 = vector.broadcast %cst : f32 to vector<8x128xf32>
    %cst_1 = arith.constant 0.000000e+00 : f32
    %4 = vector.broadcast %cst_1 : f32 to vector<8x128xf32>
    %c0 = arith.constant 0 : index
    %c0_2 = arith.constant 0 : index
    %5 = vector.load %arg2[%c0, %c0_2] : memref<8x256xf32, #tpu.memory_space<vmem>>, vector<8x128xf32>
    %6 = arith.addf %3, %5 : vector<8x128xf32>
    %7 = arith.mulf %5, %5 : vector<8x128xf32>
    %8 = arith.addf %4, %7 : vector<8x128xf32>
    %c0_3 = arith.constant 0 : index
    %c128 = arith.constant 128 : index
    %9 = vector.load %arg2[%c0_3, %c128] : memref<8x256xf32, #tpu.memory_space<vmem>>, vector<8x128xf32>
    %10 = arith.addf %6, %9 : vector<8x128xf32>
    %11 = arith.mulf %9, %9 : vector<8x128xf32>
    %12 = arith.addf %8, %11 : vector<8x128xf32>
    %c0_4 = arith.constant 0 : index
    %c0_5 = arith.constant 0 : index
    %13 = vector.load %arg4[%c0_4, %c0_5] : memref<8x128xf32, #tpu.memory_space<vmem>>, vector<8x128xf32>
    %14 = arith.addf %13, %10 : vector<8x128xf32>
    %c0_6 = arith.constant 0 : index
    %c0_7 = arith.constant 0 : index
    %15 = vector.load %arg4[%c0_6, %c0_7] : memref<8x128xf32, #tpu.memory_space<vmem>>, vector<8x128xf32>
    tpu.vector_store %arg4[%c0_6, %c0_7], %14 {strides = array<i32>} : memref<8x128xf32, #tpu.memory_space<vmem>>, vector<8x128xf32>,
    %c0_8 = arith.constant 0 : index
    %c0_9 = arith.constant 0 : index
    %16 = vector.load %arg5[%c0_8, %c0_9] : memref<8x128xf32, #tpu.memory_space<vmem>>, vector<8x128xf32>
    %17 = arith.addf %16, %12 : vector<8x128xf32>
    %c0_10 = arith.constant 0 : index
    %c0_11 = arith.constant 0 : index
    %18 = vector.load %arg5[%c0_10, %c0_11] : memref<8x128xf32, #tpu.memory_space<vmem>>, vector<8x128xf32>
    tpu.vector_store %arg5[%c0_10, %c0_11], %17 {strides = array<i32>} : memref<8x128xf32, #tpu.memory_space<vmem>>, vector<8x128xf32>,
    %c0_i32_12 = arith.constant 0 : i32
    %19 = arith.cmpi eq, %arg1, %c0_i32_12 : i32
    %20 = arith.extui %19 : i1 to i32
    %c0_i32_13 = arith.constant 0 : i32
    %21 = arith.cmpi ne, %20, %c0_i32_13 : i32
    scf.if %21 {
      %c0_14 = arith.constant 0 : index
      %c0_15 = arith.constant 0 : index
      %22 = vector.load %arg4[%c0_14, %c0_15] : memref<8x128xf32, #tpu.memory_space<vmem>>, vector<8x128xf32>
      %cst_16 = arith.constant dense<0.000000e+00> : vector<8xf32>
      %23 = vector.multi_reduction <add>, %22, %cst_16 [1] : vector<8x128xf32> to vector<8xf32>
      %24 = vector.shape_cast %23 : vector<8xf32> to vector<8x1xf32>
      %cst_17 = arith.constant 0.99609375 : f32
      %25 = vector.broadcast %cst_17 : f32 to vector<8x1xf32>
      %26 = arith.mulf %24, %25 : vector<8x1xf32>
      %c0_18 = arith.constant 0 : index
      %c0_19 = arith.constant 0 : index
      %27 = vector.load %arg5[%c0_18, %c0_19] : memref<8x128xf32, #tpu.memory_space<vmem>>, vector<8x128xf32>
      %cst_20 = arith.constant dense<0.000000e+00> : vector<8xf32>
      %28 = vector.multi_reduction <add>, %27, %cst_20 [1] : vector<8x128xf32> to vector<8xf32>
      %29 = vector.shape_cast %28 : vector<8xf32> to vector<8x1xf32>
      %cst_21 = arith.constant 254.003906 : f32
      %30 = vector.broadcast %cst_21 : f32 to vector<8x1xf32>
      %31 = arith.mulf %29, %30 : vector<8x1xf32>
      %cst_22 = arith.constant 2.560000e+02 : f32
      %cst_23 = arith.constant 2.560000e+02 : f32
      %32 = arith.mulf %cst_22, %cst_23 : f32
      %33 = vector.broadcast %32 : f32 to vector<8x1xf32>
      %34 = arith.mulf %33, %31 : vector<8x1xf32>
      %cst_24 = arith.constant 2.560000e+02 : f32
      %35 = vector.broadcast %cst_24 : f32 to vector<8x1xf32>
      %36 = arith.mulf %35, %26 : vector<8x1xf32>
      %37 = arith.mulf %36, %36 : vector<8x1xf32>
      %cst_25 = arith.constant 9.99999974E-6 : f32
      %38 = vector.broadcast %cst_25 : f32 to vector<8x1xf32>
      %39 = arith.addf %37, %38 : vector<8x1xf32>
      %40 = arith.divf %34, %39 : vector<8x1xf32>
      %cst_26 = arith.constant 1.000000e+00 : f32
      %41 = vector.broadcast %cst_26 : f32 to vector<8x1xf32>
      %42 = arith.subf %40, %41 : vector<8x1xf32>
      %43 = vector.shape_cast %42 : vector<8x1xf32> to vector<8x1xf32>
      %44 = vector.broadcast %43 : vector<8x1xf32> to vector<8x128xf32>
      %c0_27 = arith.constant 0 : index
      %c0_28 = arith.constant 0 : index
      %45 = vector.load %arg3[%c0_27, %c0_28] : memref<8x128xf32, #tpu.memory_space<vmem>>, vector<8x128xf32>
      tpu.vector_store %arg3[%c0_27, %c0_28], %44 {strides = array<i32>} : memref<8x128xf32, #tpu.memory_space<vmem>>, vector<8x128xf32>,
    } else {
    }
    return
  }
  func.func @transform_0(%arg0: i32, %arg1: i32) -> (i32, i32) {
    %c0_i32 = arith.constant 0 : i32
    return %arg0, %arg1 : i32, i32
  }
  func.func @transform_1(%arg0: i32, %arg1: i32) -> (i32, i32) {
    %c0_i32 = arith.constant 0 : i32
    %c0_i32_0 = arith.constant 0 : i32
    return %arg0, %c0_i32 : i32, i32
  }
}

</mosaic_0001>

<llo_original>
// kernel: tpu_custom_call.1
$region0: #{tpu_custom_call.1}
  #allocation0 [shape = 'u32[]', space=smem, size = 0x4, offset = 0x4, fixed_abs, tag = 'smem constant byte address 0x4 - core index']
  #allocation1 [shape = 'u32[72,128]{1,0:T(1,128)}', space=vmem, size = 0x9000, scoped, tag = 'internal scratch']
  #allocation2 [shape = 'f32[8,128]{1,0:T(8,128)}', space=vmem, size = 0x1000, scoped, tag = 'scratch operand']
  #allocation3 [shape = 'f32[8,128]{1,0:T(8,128)}', space=vmem, size = 0x1000, scoped, tag = 'scratch operand']
  %s0 = inlined_call_operand.hbm [shape: f32[8,256], index: 0, kind: input, shape index: {}]
  %s1 = inlined_call_operand.hbm [shape: f32[8,128], index: 1, kind: output, shape index: {}]
  %s2 = sld [smem:[#allocation0]]
  $region26: #{tpu_custom_call.1} parent=0
    _
  %s4 = ssub.s32 1, %s2
  %s5 = scalar_select 0, %s4, %s2
  $region1: #{tpu_custom_call.1} parent=0
    #allocation4 [shape = 'u8[8192]{0}', space=vmem, size = 0x2000, scoped, tag = 'input window, operand 0, single buffered']
    #allocation5 [shape = 's32[1]{0}', space=sflag, size = 0x4, scoped, tag = 'scoped memory for tpu_custom_call.1']
    #allocation6 [shape = 's32[1]{0}', space=sflag, size = 0x4, scoped, tag = 'scoped memory for tpu_custom_call.1']
    #allocation7 [shape = 'u8[4096]{0}', space=vmem, size = 0x1000, scoped, tag = 'output window, operand 0, single buffered']
    %6 = vsyncpa [#allocation5], 0
    %7 = vsyncpa [#allocation6], 0
    // Predicated region
    $region2: #{tpu_custom_call.1} parent=1 // pred_check
      _
    $region3: #{tpu_custom_call.1} parent=1 // pred_check_branch
      %9 = sbr.rel (0) target = $region5
    $region4: #{tpu_custom_call.1} parent=1 // pred_region
      %11 = vsyncadd [#allocation5], 0
      %s13 = sshll.u32 %s0, 4
      %s14 = int_to_ptr.hbm [resolvable:$true] %s13
      %s15 = sshll.u32 [#allocation4], 4
      %s16 = int_to_ptr.vmem [resolvable:$true] %s15
      %18 = dma.hbm_to_vmem [thread:$0]  %s14, 256, %s16, [#allocation5]
    $region5: #{tpu_custom_call.1} parent=1 // pred_fallthru
      _
    // Predicated region
    $region6: #{tpu_custom_call.1} parent=1 // pred_check
      _
    $region7: #{tpu_custom_call.1} parent=1 // pred_check_branch
      %20 = sbr.rel (0) target = $region9
    $region8: #{tpu_custom_call.1} parent=1 // pred_region
      %22 = dma.done [#allocation5], 256
    $region9: #{tpu_custom_call.1} parent=1 // pred_fallthru
      _
    %p23 = scmp.eq.s32.totalorder 0, 0
    // Predicated region
    $region10: #{tpu_custom_call.1} parent=1 // pred_check
      %p24 = pneg %p23
    $region11: #{tpu_custom_call.1} parent=1 // pred_check_branch
      %26 = sbr.rel (%p24) target = $region13
    $region12: #{tpu_custom_call.1} parent=1 // pred_region
      %27 = vst [vmem:[#allocation2] sm:$0xff] 0.0
      %28 = vst [vmem:[#allocation3] sm:$0xff] 0.0
    $region13: #{tpu_custom_call.1} parent=1 // pred_fallthru
      _
    %v29 = vld [vmem:[#allocation4] sm:$0xff]
    %v30 = vadd.f32 %v29, 0.0
    %v31 = vmul.f32 %v29, %v29
    %v32 = vadd.f32 %v31, 0.0
    %v33 = vld [vmem:[#allocation4 + $0x8] sm:$0xff]
    %v34 = vadd.f32 %v30, %v33
    %v35 = vmul.f32 %v33, %v33
    %v36 = vadd.f32 %v32, %v35
    %v37 = vld [vmem:[#allocation2] sm:$0xff]
    %v38 = vadd.f32 %v37, %v34
    %39 = vst [vmem:[#allocation2] sm:$0xff] %v38
    %v40 = vld [vmem:[#allocation3] sm:$0xff]
    %v41 = vadd.f32 %v40, %v36
    %42 = vst [vmem:[#allocation3] sm:$0xff] %v41
    // Predicated region
    $region14: #{tpu_custom_call.1} parent=1 // pred_check
      %p43 = pneg %p23
    $region15: #{tpu_custom_call.1} parent=1 // pred_check_branch
      %45 = sbr.rel (%p43) target = $region17
    $region16: #{tpu_custom_call.1} parent=1 // pred_region
      %v46 = vld [vmem:[#allocation2] sm:$0xff]
      %47 = vadd.xlane.f32.xlu0 %v46
      %v48 = vpop.xlane.xlu0 %47
      %v49 = vmul.f32 %v48, 0.99609375
      %v50 = vld [vmem:[#allocation3] sm:$0xff]
      %51 = vadd.xlane.f32.xlu0 %v50
      %v52 = vpop.xlane.xlu0 %51
      %v53 = vmul.f32 %v52, 254.0039
      %v54 = vmul.f32 %v53, 65536.0
      %v55 = vmul.f32 %v49, 256.0
      %v56 = vmul.f32 %v55, %v55
      %v57 = vadd.f32 %v56, 1e-05
      %v58 = vrcp.pop %v57
      %v59 = vmul.f32 %v57, %v58
      %v60 = vsub.f32 1.0, %v59
      %v61 = vmul.f32 %v58, %v60
      %v62 = vadd.f32 %v58, %v61
      %vm63 = vweird.f32 %v57
      %vm64 = vweird.f32 %v58
      %vm65 = vmor %vm63, %vm64
      %v66 = vsel %vm65, %v58, %v62
      %v67 = vand.u32 2147483647, %v57
      %vm68 = vcmp.eq.f32.partialorder %v67, 8.507059e+37
      %v69 = vand.u32 %v57, 2147483648
      %v70 = vor.u32 1.1754944e-38, %v69
      %v71 = vsel %vm68, %v70, %v66
      %v72 = vmul.f32 %v54, %v71
      %v73 = vsub.f32 %v72, 1.0
      %74 = vst [vmem:[#allocation7] sm:$0xff] %v73
    $region17: #{tpu_custom_call.1} parent=1 // pred_fallthru
      _
    // Predicated region
    $region18: #{tpu_custom_call.1} parent=1 // pred_check
      _
    $region19: #{tpu_custom_call.1} parent=1 // pred_check_branch
      %76 = sbr.rel (0) target = $region21
    $region20: #{tpu_custom_call.1} parent=1 // pred_region
      %78 = vsyncadd [#allocation6], 0
      %s80 = sshll.u32 [#allocation7], 4
      %s81 = int_to_ptr.vmem [resolvable:$true] %s80
      %s82 = sshll.u32 %s1, 4
      %s83 = int_to_ptr.hbm [resolvable:$true] %s82
      %85 = dma.vmem_to_hbm [thread:$0]  %s81, 128, %s83, [#allocation6]
    $region21: #{tpu_custom_call.1} parent=1 // pred_fallthru
      _
    // Predicated region
    $region22: #{tpu_custom_call.1} parent=1 // pred_check
      _
    $region23: #{tpu_custom_call.1} parent=1 // pred_check_branch
      %87 = sbr.rel (0) target = $region25
    $region24: #{tpu_custom_call.1} parent=1 // pred_region
      %89 = dma.done [#allocation6], 128
    $region25: #{tpu_custom_call.1} parent=1 // pred_fallthru
      _
    %90 = vsyncpa [#allocation5], 1
    %91 = vsyncpa [#allocation6], 1

</llo_original>
